<compile_context>
chip_gen: v5e
topology: v5e:2x2
jax: 0.10.0
libtpu: 0.0.40
codegen_flags: <defaults>
</compile_context>

<pallas_src>
import functools

import jax
import jax.numpy as jnp
from jax import lax
from jax.experimental import pallas as pl
from jax.experimental.pallas import tpu as pltpu


def _round_up(x, m):
    return (x + m - 1) // m * m


def _gce_kernel(pred_ref, labels_ref, out_ref, *, q, n_valid, block_rows):
    x = pred_ref[...].astype(jnp.float32)                 # (TM, C_pad)
    lbl = labels_ref[...]                                  # (TM, 1) int32

    # --- logsumexp over the class axis (no full softmax materialized) ---
    m = jnp.max(x, axis=1, keepdims=True)                  # (TM, 1)
    e = jnp.exp(x - m)                                     # (TM, C_pad)
    denom = jnp.sum(e, axis=1, keepdims=True)              # (TM, 1)
    log_z = m + jnp.log(denom)                             # (TM, 1)

    # --- logit of the true class via one-hot dot (padded cols hold -1e30,
    #     but are multiplied by 0 so they never contribute) ---
    col_ids = lax.broadcasted_iota(jnp.int32, x.shape, 1)  # (TM, C_pad)
    one_hot = (col_ids == lbl).astype(jnp.float32)         # (TM, C_pad)
    x_y = jnp.sum(one_hot * x, axis=1, keepdims=True)      # (TM, 1)

    # --- p_y = clamp(softmax(x)[label], 1e-7, 1.0); gce = (1 - p_y^q)/q ---
    p_y = jnp.clip(jnp.exp(x_y - log_z), 1e-7, 1.0)        # (TM, 1)
    pow_q = jnp.exp(q * jnp.log(p_y))                      # p_y >= 1e-7 -> log safe
    gce = (1.0 - pow_q) / q                                # (TM, 1)

    # --- zero out batch-padding rows of the last tile ---
    row0 = pl.program_id(0) * block_rows
    row_ids = row0 + lax.broadcasted_iota(jnp.int32, (block_rows, 1), 0)
    out_ref[...] = jnp.where(row_ids < n_valid, gce, 0.0)


def generalized_cross_entropy(pred, labels, num_classes, q=0.7, block_rows=None):
    """pred: (N, C) float, labels: (N,) int -> scalar f32 (mean GCE)."""
    N, C = pred.shape
    assert C == num_classes

    # Lane-dense class axis.
    c_pad = _round_up(C, 128)

    # Batch tile: multiple of 8, capped so double-buffered logits tiles stay
    # well inside the scoped VMEM limit on every generation (incl. v7x 64 MiB).
    if block_rows is None:
        vmem_budget = 16 * 1024 * 1024                    # bytes for 2x pred tile
        tm = max(8, vmem_budget // (2 * c_pad * 4))
        tm = min(tm, 1024, _round_up(N, 8))
        block_rows = max(8, (tm // 8) * 8)
    tm = block_rows
    n_pad = _round_up(N, tm)
    num_tiles = n_pad // tm

    # Pad logits with -1e30: padded class lanes vanish under softmax; padded
    # batch rows stay finite (uniform) and are masked to 0 in-kernel.
    pred_pad = jnp.pad(
        pred.astype(jnp.float32),
        ((0, n_pad - N), (0, c_pad - C)),
        constant_values=-1e30,
    )
    labels_pad = jnp.pad(labels.astype(jnp.int32), (0, n_pad - N)).reshape(n_pad, 1)

    kernel = functools.partial(
        _gce_kernel, q=float(q), n_valid=N, block_rows=tm
    )

    cost = pl.CostEstimate(
        flops=6 * n_pad * c_pad,
        transcendentals=n_pad * c_pad + 4 * n_pad,
        bytes_accessed=pred_pad.size * 4 + labels_pad.size * 4 + n_pad * 4,
    )

    gce_rows = pl.pallas_call(
        kernel,
        out_shape=jax.ShapeDtypeStruct((n_pad, 1), jnp.float32),
        grid_spec=pltpu.PrefetchScalarGridSpec(
            num_scalar_prefetch=0,
            grid=(num_tiles,),
            in_specs=[
                pl.BlockSpec((tm, c_pad), lambda i: (i, 0)),   # logits tile
                pl.BlockSpec((tm, 1), lambda i: (i, 0)),       # labels tile
            ],
            out_specs=pl.BlockSpec((tm, 1), lambda i: (i, 0)),  # per-row gce
        ),
        compiler_params=pltpu.CompilerParams(
            dimension_semantics=("parallel",),                  # megacore-shardable
        ),
        cost_estimate=cost,
    )(pred_pad, labels_pad)

    # Padded rows are already zero; tiny final reduce + single divide in XLA.
    return jnp.sum(gce_rows) / jnp.float32(N)


def _reference(pred, labels, num_classes, q):
    p = jax.nn.softmax(pred.astype(jnp.float32), axis=1)
    p = jnp.clip(p, 1e-7, 1.0)
    oh = jax.nn.one_hot(labels, num_classes, dtype=jnp.float32)
    gce = (1.0 - jnp.power(jnp.sum(oh * p, axis=1), q)) / q
    return gce.mean()


if __name__ == "__main__":
    key = jax.random.PRNGKey(0)

    # Small case (matches the module's typical usage).
    k1, k2, k3, k4 = jax.random.split(key, 4)
    N, num_classes, q = 8, 10, 0.7
    pred = jax.random.normal(k1, (N, num_classes), dtype=jnp.float32)
    labels = jax.random.randint(k2, (N,), 0, num_classes, dtype=jnp.int32)

    loss = generalized_cross_entropy(pred, labels, num_classes, q=q)
    jax.block_until_ready(loss)
    ref = _reference(pred, labels, num_classes, q)
    assert jnp.allclose(loss, ref, rtol=1e-5, atol=1e-5), (loss, ref)

    # Larger, non-multiple-of-tile case: exercises the batch grid + row masking.
    N2 = 300
    pred2 = jax.random.normal(k3, (N2, num_classes), dtype=jnp.float32)
    labels2 = jax.random.randint(k4, (N2,), 0, num_classes, dtype=jnp.int32)
    loss2 = generalized_cross_entropy(pred2, labels2, num_classes, q=q, block_rows=64)
    jax.block_until_ready(loss2)
    ref2 = _reference(pred2, labels2, num_classes, q)
    assert jnp.allclose(loss2, ref2, rtol=1e-5, atol=1e-5), (loss2, ref2)

    print("KERNEL_OK")
</pallas_src>

<mosaic_0001>
module attributes {stable_mosaic.version = 11 : i64} {
  func.func @_gce_kernel(%arg0: i32, %arg1: memref<8x128xf32, #tpu.memory_space<vmem>>, %arg2: memref<8x1xi32, #tpu.memory_space<vmem>>, %arg3: memref<8x1xf32, #tpu.memory_space<vmem>>) attributes {dimension_semantics = [#tpu.dimension_semantics<parallel>], iteration_bounds = array<i64: 1>, scalar_prefetch = 0 : i64, scratch_operands = 0 : i64, tpu.core_type = #tpu.core_type<tc>, window_params = [{transform_indices = @transform_0, window_bounds = array<i64: 8, 128>}, {transform_indices = @transform_1, window_bounds = array<i64: 8, 1>}, {transform_indices = @transform_2, window_bounds = array<i64: 8, 1>}]} {
    %c0 = arith.constant 0 : index
    %c0_0 = arith.constant 0 : index
    %0 = vector.load %arg1[%c0, %c0_0] : memref<8x128xf32, #tpu.memory_space<vmem>>, vector<8x128xf32>
    %c0_1 = arith.constant 0 : index
    %c0_2 = arith.constant 0 : index
    %1 = vector.load %arg2[%c0_1, %c0_2] : memref<8x1xi32, #tpu.memory_space<vmem>>, vector<8x1xi32>
    %cst = arith.constant dense<0xFF800000> : vector<8xf32>
    %2 = vector.multi_reduction <maximumf>, %0, %cst [1] : vector<8x128xf32> to vector<8xf32>
    %3 = vector.shape_cast %2 : vector<8xf32> to vector<8x1xf32>
    %4 = vector.broadcast %3 : vector<8x1xf32> to vector<8x128xf32>
    %5 = arith.subf %0, %4 : vector<8x128xf32>
    %6 = math.exp %5 : vector<8x128xf32>
    %cst_3 = arith.constant dense<0.000000e+00> : vector<8xf32>
    %7 = vector.multi_reduction <add>, %6, %cst_3 [1] : vector<8x128xf32> to vector<8xf32>
    %8 = vector.shape_cast %7 : vector<8xf32> to vector<8x1xf32>
    %9 = math.log %8 : vector<8x1xf32>
    %10 = arith.addf %3, %9 : vector<8x1xf32>
    %11 = tpu.iota {dimensions = array<i32: 1>} : vector<8x128xi32>
    %12 = vector.broadcast %1 : vector<8x1xi32> to vector<8x128xi32>
    %13 = arith.cmpi eq, %11, %12 : vector<8x128xi32>
    %14 = arith.extui %13 : vector<8x128xi1> to vector<8x128xi32>
    %15 = arith.sitofp %14 : vector<8x128xi32> to vector<8x128xf32>
    %16 = arith.mulf %15, %0 : vector<8x128xf32>
    %cst_4 = arith.constant dense<0.000000e+00> : vector<8xf32>
    %17 = vector.multi_reduction <add>, %16, %cst_4 [1] : vector<8x128xf32> to vector<8xf32>
    %18 = vector.shape_cast %17 : vector<8xf32> to vector<8x1xf32>
    %19 = arith.subf %18, %10 : vector<8x1xf32>
    %20 = math.exp %19 : vector<8x1xf32>
    %cst_5 = arith.constant 1.000000e-07 : f32
    %cst_6 = arith.constant 1.000000e+00 : f32
    %21 = vector.broadcast %cst_5 : f32 to vector<8x1xf32>
    %22 = arith.maximumf %21, %20 : vector<8x1xf32>
    %23 = vector.broadcast %cst_6 : f32 to vector<8x1xf32>
    %24 = arith.minimumf %23, %22 : vector<8x1xf32>
    %25 = math.log %24 : vector<8x1xf32>
    %cst_7 = arith.constant 0.699999988 : f32
    %26 = vector.broadcast %cst_7 : f32 to vector<8x1xf32>
    %27 = arith.mulf %26, %25 : vector<8x1xf32>
    %28 = math.exp %27 : vector<8x1xf32>
    %cst_8 = arith.constant 1.000000e+00 : f32
    %29 = vector.broadcast %cst_8 : f32 to vector<8x1xf32>
    %30 = arith.subf %29, %28 : vector<8x1xf32>
    %cst_9 = arith.constant 0.699999988 : f32
    %31 = vector.broadcast %cst_9 : f32 to vector<8x1xf32>
    %32 = arith.divf %30, %31 : vector<8x1xf32>
    %c8_i32 = arith.constant 8 : i32
    %33 = arith.muli %arg0, %c8_i32 : i32
    %34 = tpu.iota {dimensions = array<i32: 0>} : vector<8x1xi32>
    %35 = vector.broadcast %33 : i32 to vector<8x1xi32>
    %36 = arith.addi %35, %34 : vector<8x1xi32>
    %c8_i32_10 = arith.constant 8 : i32
    %37 = vector.broadcast %c8_i32_10 : i32 to vector<8x1xi32>
    %38 = arith.cmpi slt, %36, %37 : vector<8x1xi32>
    %cst_11 = arith.constant 0.000000e+00 : f32
    %39 = vector.broadcast %cst_11 : f32 to vector<8x1xf32>
    %40 = arith.select %38, %32, %39 : vector<8x1xi1>, vector<8x1xf32>
    %c0_12 = arith.constant 0 : index
    %c0_13 = arith.constant 0 : index
    %41 = vector.load %arg3[%c0_12, %c0_13] : memref<8x1xf32, #tpu.memory_space<vmem>>, vector<8x1xf32>
    tpu.vector_store %arg3[%c0_12, %c0_13], %40 {strides = array<i32>} : memref<8x1xf32, #tpu.memory_space<vmem>>, vector<8x1xf32>,
    return
  }
  func.func @transform_0(%arg0: i32) -> (i32, i32) {
    %c0_i32 = arith.constant 0 : i32
    %c0_i32_0 = arith.constant 0 : i32
    return %arg0, %c0_i32 : i32, i32
  }
  func.func @transform_1(%arg0: i32) -> (i32, i32) {
    %c0_i32 = arith.constant 0 : i32
    %c0_i32_0 = arith.constant 0 : i32
    return %arg0, %c0_i32 : i32, i32
  }
  func.func @transform_2(%arg0: i32) -> (i32, i32) {
    %c0_i32 = arith.constant 0 : i32
    %c0_i32_0 = arith.constant 0 : i32
    return %arg0, %c0_i32 : i32, i32
  }
}

</mosaic_0001>

<llo_original>
// kernel: tpu_custom_call.1
$region0: #{tpu_custom_call.1}
  #allocation0 [shape = 'u32[]', space=smem, size = 0x4, offset = 0x4, fixed_abs, tag = 'smem constant byte address 0x4 - core index']
  #allocation1 [shape = 'u32[72,128]{1,0:T(1,128)}', space=vmem, size = 0x9000, scoped, tag = 'internal scratch']
  %s0 = inlined_call_operand.vmem [shape: f32[8,128], index: 0, kind: input, shape index: {}]
  %s1 = inlined_call_operand.vmem [shape: s32[8,1], index: 1, kind: input, shape index: {}]
  %s2 = inlined_call_operand.vmem [shape: f32[8,1], index: 2, kind: output, shape index: {}]
  %s3 = sld [smem:[#allocation0]]
  $region18: #{tpu_custom_call.1} parent=0
    _
  %s5 = ssub.s32 1, %s3
  %s6 = scalar_select 0, %s5, %s3
  // Predicated region
  $region2: #{tpu_custom_call.1} parent=0 // pred_check
    _
  $region3: #{tpu_custom_call.1} parent=0 // pred_check_branch
    %8 = sbr.rel (0) target = $region5
  $region4: #{tpu_custom_call.1} parent=0 // pred_region
    _
  $region5: #{tpu_custom_call.1} parent=0 // pred_fallthru
    _
  // Predicated region
  $region6: #{tpu_custom_call.1} parent=0 // pred_check
    _
  $region7: #{tpu_custom_call.1} parent=0 // pred_check_branch
    %10 = sbr.rel (0) target = $region9
  $region8: #{tpu_custom_call.1} parent=0 // pred_region
    _
  $region9: #{tpu_custom_call.1} parent=0 // pred_fallthru
    _
  %v11 = vld [vmem:[%s0] sm:$0xff]
  %v12 = vld [vmem:[%s1] sm:$0xff]
  %13 = vmax.xlane.f32.xlu0 %v11
  %v14 = vpop.xlane.xlu0 %13
  %v15 = vsub.f32 %v11, %v14
  %v16 = vmul.f32 %v15, 1.442695
  %v17 = vpow.pop %v16
  %18 = vadd.xlane.f32.xlu0 %v17
  %v19 = vpop.xlane.xlu0 %18
  %v20 = vlog2.pop %v19
  %v21 = vmul.f32 %v20, 0.6931472
  %v22 = vadd.f32 %v14, %v21
  %v23 = vlaneseq
  %v24 = vand.u32 %v23, 127
  %25 = vset.pattern.permute.xlu0 0
  %26 = vperm.xlu0 %25, %v12
  %v27 = vpop.permute.xlu0 %26
  %vm28 = vcmp.eq.s32.totalorder %v24, %v27
  %v29 = vsel %vm28, 1, 0
  %v30 = vcvt.s32.f32 %v29
  %v31 = vmul.f32 %v30, %v11
  %32 = vadd.xlane.f32.xlu0 %v31
  %v33 = vpop.xlane.xlu0 %32
  %v34 = vsub.f32 %v33, %v22
  %v35 = vmul.f32 %v34, 1.442695
  %v36 = vpow.pop %v35
  %v37 = vmax.f32 %v36, 1e-07
  %v38 = vmin.f32 %v37, 1.0
  %v39 = vlog2.pop %v38
  %v40 = vmul.f32 %v39, 0.6931472
  %v41 = vmul.f32 %v40, 0.7
  %v42 = vmul.f32 %v41, 1.442695
  %v43 = vpow.pop %v42
  %v44 = vsub.f32 1.0, %v43
  %v45 = vrcp.pop 0.7
  %v46 = vmul.f32 0.7, %v45
  %v47 = vsub.f32 1.0, %v46
  %v48 = vmul.f32 %v45, %v47
  %v49 = vadd.f32 %v45, %v48
  %vm50 = vweird.f32 %v45
  %v51 = vsel %vm50, %v45, %v49
  %v52 = vmul.f32 %v44, %v51
  %s53 = smul.u32 0, 8
  %v54 = vlaneseq
  %v55 = vshrl.u32 %v54, 7
  %v56 = vstv %s53
  %v57 = vadd.s32 %v56, %v55
  %vm58 = vcmp.lt.s32.totalorder %v57, 8
  %v59 = vsel %vm58, %v52, 0.0
  %vm60 = vcmask 7168
  %61 = vst.msk [vmem:[%s2] sm:$0xff] %vm60, %v59
  // Predicated region
  $region10: #{tpu_custom_call.1} parent=0 // pred_check
    _
  $region11: #{tpu_custom_call.1} parent=0 // pred_check_branch
    %63 = sbr.rel (0) target = $region13
  $region12: #{tpu_custom_call.1} parent=0 // pred_region
    _
  $region13: #{tpu_custom_call.1} parent=0 // pred_fallthru
    _
  // Predicated region
  $region14: #{tpu_custom_call.1} parent=0 // pred_check
    _
  $region15: #{tpu_custom_call.1} parent=0 // pred_check_branch
    %65 = sbr.rel (0) target = $region17
  $region16: #{tpu_custom_call.1} parent=0 // pred_region
    _
  $region17: #{tpu_custom_call.1} parent=0 // pred_fallthru
    _

</llo_original>
